<compile_context>
chip_gen: v7x
topology: tpu7x:2x2x1
jax: 0.10.0
libtpu: 0.0.40
codegen_flags: <defaults>
</compile_context>

<pallas_src>
import numpy as np
import jax
import jax.numpy as jnp
from jax import lax
from jax.experimental import pallas as pl
from jax.experimental.pallas import tpu as pltpu


class HParams:
    max_len_seq = 16
    max_len_pad = 24
    min_len_seg = 4
    max_len_seg = 8


# ----------------------------------------------------------------------------
# Pallas kernel: build W on the VPU, one batched MXU matmul per grid step
# ----------------------------------------------------------------------------
def _interp_kernel(xt_ref, fl_ref, w0_ref, w1_ref, o_ref):
    """
    xt_ref : VMEM (bb, C, T_in)  f32 -- x transposed (channels on sublanes)
    fl_ref : VMEM (bb, 1, T_out) i32 -- floor gather index per output frame
    w0_ref : VMEM (bb, 1, T_out) f32 -- mask * (1 - lambda)
    w1_ref : VMEM (bb, 1, T_out) f32 -- mask * lambda
    o_ref  : VMEM (bb, C, T_out)     -- output; lane dim = T_out (lane-dense)
    """
    bb, _, t_in = xt_ref.shape
    t_out = o_ref.shape[2]

    # One-hot style W build, entirely in VMEM on the VPU (no HBM round-trip):
    #   W[b, fl, t] = w0[b, t];  W[b, fl+1, t] = w1[b, t];  else 0.
    row = lax.broadcasted_iota(jnp.int32, (bb, t_in, t_out), 1)
    fl = fl_ref[...]
    w = ((row == fl).astype(jnp.float32) * w0_ref[...]
         + (row == (fl + 1)).astype(jnp.float32) * w1_ref[...])     # (bb,T_in,T_out)

    # Single batched MXU matmul for the whole block: out[b] = x[b]^T @ W[b].
    o_ref[...] = jnp.einsum(
        "bct,bto->bco", xt_ref[...], w,
        preferred_element_type=jnp.float32,
        precision=lax.Precision.HIGHEST,
    ).astype(o_ref.dtype)


def interp_lnr_pallas(x, gfl, glam, gmask, *, n_blocks=None):
    """x: (B, T_in, C); gfl/glam/gmask: (B, T_out) -> (B, T_out, C)."""
    B, T_in, C = x.shape
    T_out = gfl.shape[1]

    if n_blocks is None:
        # At most 2 grid steps: one batch block per TensorCore on v7x; the
        # extra ~0.35us step is negligible on single-TC v5e/v6e.
        n_blocks = min(B, 2)
    n_blocks = max(1, min(n_blocks, B))
    bb = pl.cdiv(B, n_blocks)
    Bp = bb * n_blocks

    # Layout plumbing in the wrapper (not compute): channels onto sublanes so
    # the kernel's stored lane dim is T_out, and frame streams into (B,1,T_out).
    x_t = jnp.transpose(x, (0, 2, 1)).astype(jnp.float32)            # (B, C, T_in)
    fl = gfl.astype(jnp.int32)[:, None, :]                           # (B, 1, T_out)
    w0 = (gmask * (1.0 - glam)).astype(jnp.float32)[:, None, :]
    w1 = (gmask * glam).astype(jnp.float32)[:, None, :]

    if Bp != B:
        pad = ((0, Bp - B), (0, 0), (0, 0))
        # Padded rows carry zero weights -> output rows are zero (then sliced off).
        x_t, fl, w0, w1 = (jnp.pad(a, pad) for a in (x_t, fl, w0, w1))

    out_t = pl.pallas_call(
        _interp_kernel,
        out_shape=jax.ShapeDtypeStruct((Bp, C, T_out), x.dtype),
        grid=(n_blocks,),
        in_specs=[
            pl.BlockSpec((bb, C, T_in), lambda i: (i, 0, 0)),
            pl.BlockSpec((bb, 1, T_out), lambda i: (i, 0, 0)),
            pl.BlockSpec((bb, 1, T_out), lambda i: (i, 0, 0)),
            pl.BlockSpec((bb, 1, T_out), lambda i: (i, 0, 0)),
        ],
        out_specs=pl.BlockSpec((bb, C, T_out), lambda i: (i, 0, 0)),
        # Disjoint output blocks, no accumulator -> truly parallel batch axis
        # (v7x's two TensorCores each take one block; neutral on v5e/v6e).
        compiler_params=pltpu.CompilerParams(dimension_semantics=("parallel",)),
    )(x_t, fl, w0, w1)

    out_t = out_t[:B] if Bp != B else out_t
    return jnp.transpose(out_t, (0, 2, 1))                           # (B, T_out, C)


# ----------------------------------------------------------------------------
# JAX glue: index arithmetic of InterpLnr.forward -> tiny (B, T_out) streams
# ----------------------------------------------------------------------------
def build_interp_indices(scales, len_seg, len_seq, hp, T_in):
    """Returns gfl (B,T_out) int32, glam (B,T_out) f32, gmask (B,T_out) f32
    such that out[b,t] = gmask*( (1-glam)*x[b,gfl] + glam*x[b,gfl+1] )."""
    B = len_seq.shape[0]
    nseg = hp.max_len_seq // hp.min_len_seg + 1
    L2 = hp.max_len_seg * 2
    N = nseg * L2
    T_out = hp.max_len_pad

    indices = jnp.arange(L2, dtype=jnp.float32)[None, :]              # (1, L2)
    idx_scaled = indices / scales[:, None]                            # (B*nseg, L2)
    idx_fl = jnp.floor(idx_scaled)
    lam = idx_scaled - idx_fl

    idx_mask = idx_fl < (len_seg.astype(jnp.float32) - 1.0)           # (B*nseg, L2)

    offset = jnp.cumsum(len_seg.reshape(B, nseg), axis=-1)
    offset = jnp.pad(offset[:, :-1], ((0, 0), (1, 0))).reshape(-1, 1)  # exclusive prefix sum
    idx_org = idx_fl + offset.astype(jnp.float32)

    len_seq_rp = jnp.repeat(len_seq, nseg)
    idx_mask_org = idx_org < (len_seq_rp.astype(jnp.float32) - 1.0)[:, None]
    mask = jnp.logical_and(idx_mask, idx_mask_org)                    # (B*nseg, L2)

    mask_b = mask.reshape(B, N)
    fl_b = idx_org.reshape(B, N).astype(jnp.int32)
    lam_b = lam.reshape(B, N)

    # Stable compaction: valid candidates first, original (segment, pos) order kept.
    perm = jnp.argsort(jnp.logical_not(mask_b).astype(jnp.int32), axis=-1, stable=True)
    gfl = jnp.take_along_axis(fl_b, perm, axis=-1)
    glam = jnp.take_along_axis(lam_b, perm, axis=-1)
    gmask = jnp.take_along_axis(mask_b, perm, axis=-1).astype(jnp.float32)

    if N >= T_out:
        gfl, glam, gmask = gfl[:, :T_out], glam[:, :T_out], gmask[:, :T_out]
    else:
        pad = T_out - N
        gfl = jnp.pad(gfl, ((0, 0), (0, pad)))
        glam = jnp.pad(glam, ((0, 0), (0, pad)))
        gmask = jnp.pad(gmask, ((0, 0), (0, pad)))

    # Valid entries satisfy gfl <= len_seq-2 <= T_in-2 for the module's hparams
    # (max_len_seq <= max_len_pad); clamp is only a safety net for masked rows.
    gfl = jnp.clip(gfl, 0, T_in - 2)
    return gfl, glam, gmask


# ----------------------------------------------------------------------------
# Pure numpy reference mirroring the PyTorch forward, given the same randoms
# ----------------------------------------------------------------------------
def reference_forward(x, len_seq, scales, len_seg, hp):
    x = np.asarray(x, dtype=np.float32)
    scales = np.asarray(scales, dtype=np.float32)
    len_seg = np.asarray(len_seg, dtype=np.int64)
    len_seq = np.asarray(len_seq, dtype=np.int64)
    B, T, C = x.shape
    nseg = hp.max_len_seq // hp.min_len_seg + 1
    L2 = hp.max_len_seg * 2

    indices = np.tile(np.arange(L2, dtype=np.float32)[None, :], (B * nseg, 1))
    idx_scaled = indices / scales[:, None]
    idx_fl = np.floor(idx_scaled)
    lam = idx_scaled - idx_fl
    idx_mask = idx_fl < (len_seg - 1)
    offset = np.cumsum(len_seg.reshape(B, nseg), axis=-1)
    offset = np.pad(offset[:, :-1], ((0, 0), (1, 0))).reshape(-1, 1)
    idx_org = idx_fl + offset
    len_seq_rp = np.repeat(len_seq, nseg)
    idx_mask_org = idx_org < (len_seq_rp - 1)[:, None]
    mask = idx_mask & idx_mask_org

    mask_b = mask.reshape(B, nseg * L2)
    fl_b = idx_org.reshape(B, nseg * L2).astype(np.int64)
    lam_b = lam.reshape(B, nseg * L2)

    out = np.zeros((B, hp.max_len_pad, C), dtype=np.float32)
    for b in range(B):
        ys = []
        for n in range(nseg * L2):
            if mask_b[b, n]:
                f = fl_b[b, n]
                l = lam_b[b, n]
                ys.append((1.0 - l) * x[b, f] + l * x[b, f + 1])
        ys = np.stack(ys, axis=0) if ys else np.zeros((0, C), dtype=np.float32)
        L = min(ys.shape[0], hp.max_len_pad)
        out[b, :L] = ys[:hp.max_len_pad][:L]
    return out


# ----------------------------------------------------------------------------
if __name__ == "__main__":
    hp = HParams()
    nseg = hp.max_len_seq // hp.min_len_seg + 1           # max_num_seg = 5

    B, C = 2, 8
    T_in = hp.max_len_pad                                 # x: (B, max_len_pad, C)

    key = jax.random.PRNGKey(0)
    kx, ks, kl = jax.random.split(key, 3)
    x = jax.random.normal(kx, (B, T_in, C), dtype=jnp.float32)
    len_seq = jnp.array([16, 12], dtype=jnp.int32)

    # Randomness of the PyTorch forward (torch.rand / torch.randint), generated
    # deterministically with JAX PRNG instead.
    scales = jax.random.uniform(ks, (B * nseg,), dtype=jnp.float32) + 0.5
    len_seg = jax.random.randint(
        kl, (B * nseg, 1), hp.min_len_seg, hp.max_len_seg
    ).astype(jnp.int32)

    # Host-side guard (review concern): gather indices stay < T_in only when
    # len_seq <= max_len_pad, which the module's hparams guarantee.
    assert int(np.max(np.asarray(len_seq))) <= T_in, "len_seq must be <= max_len_pad"

    gfl, glam, gmask = build_interp_indices(scales, len_seg, len_seq, hp, T_in)
    out = interp_lnr_pallas(x, gfl, glam, gmask)
    out = jax.block_until_ready(out)

    ref = reference_forward(x, len_seq, scales, len_seg, hp)
    np.testing.assert_allclose(np.asarray(out), ref, rtol=1e-4, atol=1e-4)
    print("KERNEL_OK")
</pallas_src>

<mosaic_0001>
module attributes {stable_mosaic.version = 11 : i64} {
  func.func @_interp_kernel(%arg0: i32, %arg1: memref<1x8x24xf32, #tpu.memory_space<vmem>>, %arg2: memref<1x1x24xi32, #tpu.memory_space<vmem>>, %arg3: memref<1x1x24xf32, #tpu.memory_space<vmem>>, %arg4: memref<1x1x24xf32, #tpu.memory_space<vmem>>, %arg5: memref<1x8x24xf32, #tpu.memory_space<vmem>>) attributes {dimension_semantics = [#tpu.dimension_semantics<parallel>], iteration_bounds = array<i64: 2>, scalar_prefetch = 0 : i64, scratch_operands = 0 : i64, tpu.core_type = #tpu.core_type<tc>, window_params = [{transform_indices = @transform_0, window_bounds = array<i64: 1, 8, 24>}, {transform_indices = @transform_1, window_bounds = array<i64: 1, 1, 24>}, {transform_indices = @transform_2, window_bounds = array<i64: 1, 1, 24>}, {transform_indices = @transform_3, window_bounds = array<i64: 1, 1, 24>}, {transform_indices = @transform_4, window_bounds = array<i64: 1, 8, 24>}]} {
    %0 = tpu.iota {dimensions = array<i32: 1>} : vector<1x24x24xi32>
    %c0 = arith.constant 0 : index
    %c0_0 = arith.constant 0 : index
    %c0_1 = arith.constant 0 : index
    %1 = vector.load %arg2[%c0, %c0_0, %c0_1] : memref<1x1x24xi32, #tpu.memory_space<vmem>>, vector<1x1x24xi32>
    %2 = vector.broadcast %1 : vector<1x1x24xi32> to vector<1x24x24xi32>
    %3 = arith.cmpi eq, %0, %2 : vector<1x24x24xi32>
    %4 = arith.extui %3 : vector<1x24x24xi1> to vector<1x24x24xi32>
    %5 = arith.sitofp %4 : vector<1x24x24xi32> to vector<1x24x24xf32>
    %c0_2 = arith.constant 0 : index
    %c0_3 = arith.constant 0 : index
    %c0_4 = arith.constant 0 : index
    %6 = vector.load %arg3[%c0_2, %c0_3, %c0_4] : memref<1x1x24xf32, #tpu.memory_space<vmem>>, vector<1x1x24xf32>
    %7 = vector.broadcast %6 : vector<1x1x24xf32> to vector<1x24x24xf32>
    %8 = arith.mulf %5, %7 : vector<1x24x24xf32>
    %c1_i32 = arith.constant 1 : i32
    %9 = vector.broadcast %c1_i32 : i32 to vector<1x1x24xi32>
    %10 = arith.addi %1, %9 : vector<1x1x24xi32>
    %11 = vector.broadcast %10 : vector<1x1x24xi32> to vector<1x24x24xi32>
    %12 = arith.cmpi eq, %0, %11 : vector<1x24x24xi32>
    %13 = arith.extui %12 : vector<1x24x24xi1> to vector<1x24x24xi32>
    %14 = arith.sitofp %13 : vector<1x24x24xi32> to vector<1x24x24xf32>
    %c0_5 = arith.constant 0 : index
    %c0_6 = arith.constant 0 : index
    %c0_7 = arith.constant 0 : index
    %15 = vector.load %arg4[%c0_5, %c0_6, %c0_7] : memref<1x1x24xf32, #tpu.memory_space<vmem>>, vector<1x1x24xf32>
    %16 = vector.broadcast %15 : vector<1x1x24xf32> to vector<1x24x24xf32>
    %17 = arith.mulf %14, %16 : vector<1x24x24xf32>
    %18 = arith.addf %8, %17 : vector<1x24x24xf32>
    %c0_8 = arith.constant 0 : index
    %c0_9 = arith.constant 0 : index
    %c0_10 = arith.constant 0 : index
    %19 = vector.load %arg1[%c0_8, %c0_9, %c0_10] : memref<1x8x24xf32, #tpu.memory_space<vmem>>, vector<1x8x24xf32>
    "tpu.trace_start"() <{level = 10 : i32, message = "bct,bto->bco"}> : () -> ()
    %cst = arith.constant dense<0.000000e+00> : vector<1x8x24xf32>
    %20 = tpu.matmul %19, %18, %cst {dimension_numbers = #tpu.dot_dimension_numbers<[2], [1], [1], [2], [0, 0, 0, 1, 1, 2], [0], [0]>, precision = #tpu.contract_precision<fp32>} : vector<1x8x24xf32>, vector<1x24x24xf32>, vector<1x8x24xf32> -> vector<1x8x24xf32>
    "tpu.trace_stop"() : () -> ()
    %c0_11 = arith.constant 0 : index
    %c0_12 = arith.constant 0 : index
    %c0_13 = arith.constant 0 : index
    %21 = vector.load %arg5[%c0_11, %c0_12, %c0_13] : memref<1x8x24xf32, #tpu.memory_space<vmem>>, vector<1x8x24xf32>
    tpu.vector_store %arg5[%c0_11, %c0_12, %c0_13], %20 {strides = array<i32>} : memref<1x8x24xf32, #tpu.memory_space<vmem>>, vector<1x8x24xf32>,
    return
  }
  func.func @transform_0(%arg0: i32) -> (i32, i32, i32) {
    %c0_i32 = arith.constant 0 : i32
    %c0_i32_0 = arith.constant 0 : i32
    %c0_i32_1 = arith.constant 0 : i32
    return %arg0, %c0_i32, %c0_i32_0 : i32, i32, i32
  }
  func.func @transform_1(%arg0: i32) -> (i32, i32, i32) {
    %c0_i32 = arith.constant 0 : i32
    %c0_i32_0 = arith.constant 0 : i32
    %c0_i32_1 = arith.constant 0 : i32
    return %arg0, %c0_i32, %c0_i32_0 : i32, i32, i32
  }
  func.func @transform_2(%arg0: i32) -> (i32, i32, i32) {
    %c0_i32 = arith.constant 0 : i32
    %c0_i32_0 = arith.constant 0 : i32
    %c0_i32_1 = arith.constant 0 : i32
    return %arg0, %c0_i32, %c0_i32_0 : i32, i32, i32
  }
  func.func @transform_3(%arg0: i32) -> (i32, i32, i32) {
    %c0_i32 = arith.constant 0 : i32
    %c0_i32_0 = arith.constant 0 : i32
    %c0_i32_1 = arith.constant 0 : i32
    return %arg0, %c0_i32, %c0_i32_0 : i32, i32, i32
  }
  func.func @transform_4(%arg0: i32) -> (i32, i32, i32) {
    %c0_i32 = arith.constant 0 : i32
    %c0_i32_0 = arith.constant 0 : i32
    %c0_i32_1 = arith.constant 0 : i32
    return %arg0, %c0_i32, %c0_i32_0 : i32, i32, i32
  }
}

</mosaic_0001>

<llo_original>
// kernel: tpu_custom_call.1
$region0: #{tpu_custom_call.1}
  #allocation0 [shape = 'u32[]', space=smem, size = 0x4, offset = 0x4, fixed_abs, tag = 'smem constant byte address 0x4 - core index']
  #allocation1 [shape = 'u32[144,128]{1,0:T(1,128)}', space=vmem, size = 0x12000, scoped, tag = 'internal scratch']
  %s0 = inlined_call_operand.hbm [shape: f32[2,8,24], index: 0, kind: input, shape index: {}]
  %s1 = inlined_call_operand.vmem [shape: s32[2,1,24], index: 1, kind: input, shape index: {}]
  %s2 = inlined_call_operand.vmem [shape: f32[2,1,24], index: 2, kind: input, shape index: {}]
  %s3 = inlined_call_operand.vmem [shape: f32[2,1,24], index: 3, kind: input, shape index: {}]
  %s4 = inlined_call_operand.hbm [shape: f32[2,8,24], index: 4, kind: output, shape index: {}]
  %s5 = sld [smem:[#allocation0]]
  $region53: #{tpu_custom_call.1} parent=0
    _
  %s7 = ssub.s32 1, %s5
  %s8 = scalar_select 0, %s7, %s5
  $region1: #{tpu_custom_call.1} parent=0
    #allocation2 [shape = 'u8[8192]{0}', space=vmem, size = 0x2000, scoped, tag = 'input window, operand 0']
    #allocation3 [shape = 's32[2]{0}', space=sflag, size = 0x8, scoped, tag = 'scoped memory for tpu_custom_call.1']
    #allocation4 [shape = 's32[2]{0}', space=sflag, size = 0x8, scoped, tag = 'scoped memory for tpu_custom_call.1']
    #allocation5 [shape = 'u8[8192]{0}', space=vmem, size = 0x2000, scoped, tag = 'output window, operand 0']
    %9 = vsyncpa [#allocation3], 0
    %s10 = scalar_lea.sflag [#allocation3], 1
    %11 = vsyncpa %s10, 0
    %12 = vsyncpa [#allocation4], 0
    %s13 = scalar_lea.sflag [#allocation4], 1
    %14 = vsyncpa %s13, 0
    loop: start=0, step=1, limit=4
    $region2: #{tpu_custom_call.1} parent=1 // loop_pre_header
      _
    $region3: #{tpu_custom_call.1} parent=1 // loop_header
      %s16 = sphi 0, %s20
      %p17 = scmp.ge.s32.totalorder %s16, 4
      %s26 = sphi 0, %s28
      %s29 = sphi 0, %s26
      %s30 = sphi 0, %s29
      %s46 = sphi 0, %s30
      %s52 = sphi 0, %s54
      %s55 = sphi 0, %s52
      %s56 = sphi 0, %s55
      %s72 = sphi 0, %s56
      %s78 = sphi 0, %s80
      %s81 = sphi 0, %s78
      %s82 = sphi 0, %s81
      %s98 = sphi 0, %s82
      %s104 = sphi 0, %s106
      %s107 = sphi 0, %s104
      %s108 = sphi 0, %s107
      %s124 = sphi 0, %s108
      %s130 = sphi 0, %s132
      %s133 = sphi 0, %s130
      %s134 = sphi 0, %s133
      %s150 = sphi 0, %s134
    $region4: #{tpu_custom_call.1} parent=1 // loop_header_branch
      %19 = sbr.rel (%p17) target = $region8
    $region5: #{tpu_custom_call.1} parent=1 // loop_body
      %s21 = ssub.s32 %s16, 1
      %s22 = ssub.s32 %s16, 2
      %s23 = sadd.s32 %s16, 1
      %s24 = ssub.s32 %s16, %s23
      %p25 = scmp.eq.s32.totalorder %s24, 0
      %s27 = sadd.s32 %s26, 1
      %s28 = scalar_select %p25, %s26, %s27
      %p31 = pneg %p25
      %p32 = scmp.eq.s32.totalorder %s16, 1
      %p33 = por %p31, %p32
      %p34 = scmp.ne.s32.totalorder %s26, %s29
      %p35 = scmp.eq.s32.totalorder %s16, 0
      %p36 = por %p34, %p35
      %p37 = scmp.ne.s32.totalorder %s26, %s29
      %p38 = scmp.eq.s32.totalorder %s21, 1
      %p39 = por %p37, %p38
      %p40 = scmp.ne.s32.totalorder %s29, %s30
      %p41 = scmp.eq.s32.totalorder %s21, 0
      %p42 = por %p40, %p41
      %p43 = scmp.ne.s32.totalorder %s29, %s30
      %p44 = scmp.eq.s32.totalorder %s22, 1
      %p45 = por %p43, %p44
      %p47 = scmp.ne.s32.totalorder %s30, %s46
      %p48 = scmp.eq.s32.totalorder %s22, 0
      %p49 = por %p47, %p48
      %s50 = ssub.s32 %s16, %s23
      %p51 = scmp.eq.s32.totalorder %s50, 0
      %s53 = sadd.s32 %s52, 1
      %s54 = scalar_select %p51, %s52, %s53
      %p57 = pneg %p51
      %p58 = scmp.eq.s32.totalorder %s16, 1
      %p59 = por %p57, %p58
      %p60 = scmp.ne.s32.totalorder %s52, %s55
      %p61 = scmp.eq.s32.totalorder %s16, 0
      %p62 = por %p60, %p61
      %p63 = scmp.ne.s32.totalorder %s52, %s55
      %p64 = scmp.eq.s32.totalorder %s21, 1
      %p65 = por %p63, %p64
      %p66 = scmp.ne.s32.totalorder %s55, %s56
      %p67 = scmp.eq.s32.totalorder %s21, 0
      %p68 = por %p66, %p67
      %p69 = scmp.ne.s32.totalorder %s55, %s56
      %p70 = scmp.eq.s32.totalorder %s22, 1
      %p71 = por %p69, %p70
      %p73 = scmp.ne.s32.totalorder %s56, %s72
      %p74 = scmp.eq.s32.totalorder %s22, 0
      %p75 = por %p73, %p74
      %s76 = ssub.s32 %s16, %s23
      %p77 = scmp.eq.s32.totalorder %s76, 0
      %s79 = sadd.s32 %s78, 1
      %s80 = scalar_select %p77, %s78, %s79
      %p83 = pneg %p77
      %p84 = scmp.eq.s32.totalorder %s16, 1
      %p85 = por %p83, %p84
      %p86 = scmp.ne.s32.totalorder %s78, %s81
      %p87 = scmp.eq.s32.totalorder %s16, 0
      %p88 = por %p86, %p87
      %p89 = scmp.ne.s32.totalorder %s78, %s81
      %p90 = scmp.eq.s32.totalorder %s21, 1
      %p91 = por %p89, %p90
      %p92 = scmp.ne.s32.totalorder %s81, %s82
      %p93 = scmp.eq.s32.totalorder %s21, 0
      %p94 = por %p92, %p93
      %p95 = scmp.ne.s32.totalorder %s81, %s82
      %p96 = scmp.eq.s32.totalorder %s22, 1
      %p97 = por %p95, %p96
      %p99 = scmp.ne.s32.totalorder %s82, %s98
      %p100 = scmp.eq.s32.totalorder %s22, 0
      %p101 = por %p99, %p100
      %s102 = ssub.s32 %s16, %s23
      %p103 = scmp.eq.s32.totalorder %s102, 0
      %s105 = sadd.s32 %s104, 1
      %s106 = scalar_select %p103, %s104, %s105
      %p109 = pneg %p103
      %p110 = scmp.eq.s32.totalorder %s16, 1
      %p111 = por %p109, %p110
      %p112 = scmp.ne.s32.totalorder %s104, %s107
      %p113 = scmp.eq.s32.totalorder %s16, 0
      %p114 = por %p112, %p113
      %p115 = scmp.ne.s32.totalorder %s104, %s107
      %p116 = scmp.eq.s32.totalorder %s21, 1
      %p117 = por %p115, %p116
      %p118 = scmp.ne.s32.totalorder %s107, %s108
      %p119 = scmp.eq.s32.totalorder %s21, 0
      %p120 = por %p118, %p119
      %p121 = scmp.ne.s32.totalorder %s107, %s108
      %p122 = scmp.eq.s32.totalorder %s22, 1
      %p123 = por %p121, %p122
      %p125 = scmp.ne.s32.totalorder %s108, %s124
      %p126 = scmp.eq.s32.totalorder %s22, 0
      %p127 = por %p125, %p126
      %s128 = ssub.s32 %s16, %s23
      %p129 = scmp.eq.s32.totalorder %s128, 0
      %s131 = sadd.s32 %s130, 1
      %s132 = scalar_select %p129, %s130, %s131
      %p135 = pneg %p129
      %p136 = scmp.eq.s32.totalorder %s16, 1
      %p137 = por %p135, %p136
      %p138 = scmp.ne.s32.totalorder %s130, %s133
      %p139 = scmp.eq.s32.totalorder %s16, 0
      %p140 = por %p138, %p139
      %p141 = scmp.ne.s32.totalorder %s130, %s133
      %p142 = scmp.eq.s32.totalorder %s21, 1
      %p143 = por %p141, %p142
      %p144 = scmp.ne.s32.totalorder %s133, %s134
      %p145 = scmp.eq.s32.totalorder %s21, 0
      %p146 = por %p144, %p145
      %p147 = scmp.ne.s32.totalorder %s133, %s134
      %p148 = scmp.eq.s32.totalorder %s22, 1
      %p149 = por %p147, %p148
      %p151 = scmp.ne.s32.totalorder %s134, %s150
      %p152 = scmp.eq.s32.totalorder %s22, 0
      %p153 = por %p151, %p152
      %p154 = scmp.le.s32.totalorder 1, %s16
      %p155 = scmp.lt.s32.totalorder %s16, 3
      %p156 = pnand %p154, %p155
      %p157 = pneg %p156
      // Predicated region
      $region9: #{tpu_custom_call.1} parent=5 // pred_check
        _
      $region10: #{tpu_custom_call.1} parent=5 // pred_check_branch
        %159 = sbr.rel (%p156) target = $region12
      $region11: #{tpu_custom_call.1} parent=5 // pred_region
        %s160 = ssub.s32 %s16, 1
      $region12: #{tpu_custom_call.1} parent=5 // pred_fallthru
        _
      %p161 = scmp.lt.s32.totalorder %s16, 2
      // Predicated region
      $region13: #{tpu_custom_call.1} parent=5 // pred_check
        %p162 = pneg %p161
      $region14: #{tpu_custom_call.1} parent=5 // pred_check_branch
        %164 = sbr.rel (%p162) target = $region16
      $region15: #{tpu_custom_call.1} parent=5 // pred_region
        // Predicated region
        $region17: #{tpu_custom_call.1} parent=15 // pred_check
          %p165 = pneg %p36
        $region18: #{tpu_custom_call.1} parent=15 // pred_check_branch
          %167 = sbr.rel (%p165) target = $region20
        $region19: #{tpu_custom_call.1} parent=15 // pred_region
          %s168 = sand.u32 %s26, 1
          %s169 = scalar_lea.sflag [#allocation3], %s168
          %s170 = sand.u32 %s26, 1
          %s171 = smul.addr %s170, 8
          %s172 = scalar_lea.vmem [#allocation2], %s171
          %s174 = ssub.s32 128, 128
          %175 = vsyncadd %s169, %s174
          %s176 = smul.addr %s16, 128
          %s177 = scalar_lea.hbm %s0, %s176
          %s179 = sshll.u32 %s172, 4
          %s180 = int_to_ptr.vmem [resolvable:$true] %s179
          %182 = dma.hbm_to_vmem [thread:$0]  %s177, 128, %s180, %s169
        $region20: #{tpu_custom_call.1} parent=15 // pred_fallthru
          _
        // Predicated region
        $region21: #{tpu_custom_call.1} parent=15 // pred_check
          %p183 = pneg %p62
        $region22: #{tpu_custom_call.1} parent=15 // pred_check_branch
          %185 = sbr.rel (%p183) target = $region24
        $region23: #{tpu_custom_call.1} parent=15 // pred_region
          %p186 = scmp.lt.s32.totalorder %s16, 1
          %s187 = scalar_select %p186, %s16, 1
          %s188 = scalar_lea.vmem %s1, %s187
        $region24: #{tpu_custom_call.1} parent=15 // pred_fallthru
          _
        // Predicated region
        $region25: #{tpu_custom_call.1} parent=15 // pred_check
          %p189 = pneg %p88
        $region26: #{tpu_custom_call.1} parent=15 // pred_check_branch
          %191 = sbr.rel (%p189) target = $region28
        $region27: #{tpu_custom_call.1} parent=15 // pred_region
          %p192 = scmp.lt.s32.totalorder %s16, 1
          %s193 = scalar_select %p192, %s16, 1
          %s194 = scalar_lea.vmem %s2, %s193
        $region28: #{tpu_custom_call.1} parent=15 // pred_fallthru
          _
        // Predicated region
        $region29: #{tpu_custom_call.1} parent=15 // pred_check
          %p195 = pneg %p114
        $region30: #{tpu_custom_call.1} parent=15 // pred_check_branch
          %197 = sbr.rel (%p195) target = $region32
        $region31: #{tpu_custom_call.1} parent=15 // pred_region
          %p198 = scmp.lt.s32.totalorder %s16, 1
          %s199 = scalar_select %p198, %s16, 1
          %s200 = scalar_lea.vmem %s3, %s199
        $region32: #{tpu_custom_call.1} parent=15 // pred_fallthru
          _
      $region16: #{tpu_custom_call.1} parent=5 // pred_fallthru
        _
      %p201 = scmp.le.s32.totalorder 1, %s16
      %p202 = scmp.lt.s32.totalorder %s16, 3
      %p203 = pnand %p201, %p202
      %p204 = pneg %p203
      // Predicated region
      $region33: #{tpu_custom_call.1} parent=5 // pred_check
        _
      $region34: #{tpu_custom_call.1} parent=5 // pred_check_branch
        %206 = sbr.rel (%p203) target = $region36
      $region35: #{tpu_custom_call.1} parent=5 // pred_region
        %s207 = ssub.s32 %s16, 1
        %s208 = sand.u32 %s29, 1
        %s209 = scalar_lea.sflag [#allocation3], %s208
        %s210 = sand.u32 %s29, 1
        %s211 = smul.addr %s210, 8
        %s212 = scalar_lea.vmem [#allocation2], %s211
        // Predicated region
        $region37: #{tpu_custom_call.1} parent=35 // pred_check
          %p213 = pneg %p42
        $region38: #{tpu_custom_call.1} parent=35 // pred_check_branch
          %215 = sbr.rel (%p213) target = $region40
        $region39: #{tpu_custom_call.1} parent=35 // pred_region
          %216 = dma.done %s209, 128
        $region40: #{tpu_custom_call.1} parent=35 // pred_fallthru
          _
        %s217 = sand.u32 %s29, 1
        %s218 = scalar_lea.sflag [#allocation3], %s217
        %s219 = sand.u32 %s29, 1
        %s220 = smul.addr %s219, 8
        %s221 = scalar_lea.vmem [#allocation2], %s220
        %p222 = pneg %p42
        %p223 = pneg %p39
        %p224 = scmp.lt.s32.totalorder %s21, 1
        %s225 = scalar_select %p224, %s21, 1
        %s226 = scalar_lea.vmem %s1, %s225
        %p227 = pneg %p68
        %p228 = pneg %p65
        %p229 = scmp.lt.s32.totalorder %s21, 1
        %s230 = scalar_select %p229, %s21, 1
        %s231 = scalar_lea.vmem %s2, %s230
        %p232 = pneg %p94
        %p233 = pneg %p91
        %p234 = scmp.lt.s32.totalorder %s21, 1
        %s235 = scalar_select %p234, %s21, 1
        %s236 = scalar_lea.vmem %s3, %s235
        %p237 = pneg %p120
        %p238 = pneg %p117
        %p239 = pneg %p146
        %p240 = pneg %p143
        %s241 = sand.u32 %s133, 1
        %s242 = scalar_lea.sflag [#allocation4], %s241
        %s243 = sand.u32 %s133, 1
        %s244 = smul.addr %s243, 8
        %s245 = scalar_lea.vmem [#allocation5], %s244
        %p246 = scmp.lt.s32.totalorder %s21, 1
        %s247 = scalar_select %p246, %s21, 1
        %s248 = scalar_lea.vmem %s1, %s247
        %p249 = scmp.lt.s32.totalorder %s21, 1
        %s250 = scalar_select %p249, %s21, 1
        %s251 = scalar_lea.vmem %s2, %s250
        %p252 = scmp.lt.s32.totalorder %s21, 1
        %s253 = scalar_select %p252, %s21, 1
        %s254 = scalar_lea.vmem %s3, %s253
        %v255 = vlaneseq
        %v256 = vshrl.u32 %v255, 7
        %v257 = vadd.s32 %v256, 8
        %v258 = vadd.s32 %v256, 16
        %v259 = vld [vmem:[%s248] sm:$0x1]
        %v260 = vlaneseq
        %v261 = vshrl.u32 %v260, 7
        %v262 = vsub.s32 0, %v261
        %v263 = vrot.slane %v259, %v262
        %vm264 = vcmp.eq.s32.totalorder %v256, %v263
        %vm265 = vcmp.eq.s32.totalorder %v257, %v263
        %vm266 = vcmp.eq.s32.totalorder %v258, %v263
        %v267 = vsel %vm264, 1, 0
        %v268 = vsel %vm265, 1, 0
        %v269 = vsel %vm266, 1, 0
        %v270 = vcvt.s32.f32 %v267
        %v271 = vcvt.s32.f32 %v268
        %v272 = vcvt.s32.f32 %v269
        %v273 = vld [vmem:[%s251] sm:$0x1]
        %v275 = vlaneseq
        %v276 = vshrl.u32 %v275, 7
        %v277 = vsub.s32 0, %v276
        %v278 = vrot.slane %v273, %v277
        %v280 = vmul.f32 %v270, %v278
        %v281 = vmul.f32 %v271, %v278
        %v282 = vmul.f32 %v272, %v278
        %v283 = vadd.s32 %v259, 1
        %v284 = vlaneseq
        %v285 = vshrl.u32 %v284, 7
        %v286 = vsub.s32 0, %v285
        %v287 = vrot.slane %v283, %v286
        %vm288 = vcmp.eq.s32.totalorder %v256, %v287
        %vm289 = vcmp.eq.s32.totalorder %v257, %v287
        %vm290 = vcmp.eq.s32.totalorder %v258, %v287
        %v291 = vsel %vm288, 1, 0
        %v292 = vsel %vm289, 1, 0
        %v293 = vsel %vm290, 1, 0
        %v294 = vcvt.s32.f32 %v291
        %v295 = vcvt.s32.f32 %v292
        %v296 = vcvt.s32.f32 %v293
        %v297 = vld [vmem:[%s254] sm:$0x1]
        %v299 = vlaneseq
        %v300 = vshrl.u32 %v299, 7
        %v301 = vsub.s32 0, %v300
        %v302 = vrot.slane %v297, %v301
        %v304 = vmul.f32 %v294, %v302
        %v305 = vmul.f32 %v295, %v302
        %v306 = vmul.f32 %v296, %v302
        %v307 = vadd.f32 %v280, %v304
        %v308 = vadd.f32 %v281, %v305
        %v309 = vadd.f32 %v282, %v306
        %v310 = vld [vmem:[%s212] sm:$0xff]
        %vm311 = vcmask 195584
        %v313 = vsel %vm311, %v310, 0
        %315 = vmatprep.subr.mxu0 0.0
        %v316 = vand.u32 %v307, 4294901760
        %317 = vmatpush1.msra.mxu0 %v316
        %318 = vmatprep.subr.mxu0 0.0
        %v319 = vand.u32 %v308, 4294901760
        %320 = vmatpush1.msra.mxu0 %v319
        %321 = vmatprep.subr.mxu0 0.0
        %v322 = vand.u32 %v309, 4294901760
        %323 = vmatpush1.msra.mxu0 %v322
        %324 = vmatprep.subr.mxu0 0.0
        %325 = vmatpush1.msra.mxu0 0.0
        %326 = vmatprep.subr.mxu0 0.0
        %327 = vmatpush1.msra.mxu0 0.0
        %328 = vmatprep.subr.mxu0 0.0
        %329 = vmatpush1.msra.mxu0 0.0
        %330 = vmatprep.subr.mxu0 0.0
        %331 = vmatpush1.msra.mxu0 0.0
        %332 = vmatprep.subr.mxu0 0.0
        %333 = vmatpush1.msra.mxu0 0.0
        %334 = vmatprep.subr.mxu0 0.0
        %335 = vmatpush1.msra.mxu0 0.0
        %336 = vmatprep.subr.mxu0 0.0
        %337 = vmatpush1.msra.mxu0 0.0
        %338 = vmatprep.subr.mxu0 0.0
        %339 = vmatpush1.msra.mxu0 0.0
        %340 = vmatprep.subr.mxu0 0.0
        %341 = vmatpush1.msra.mxu0 0.0
        %342 = vmatprep.subr.mxu0 0.0
        %343 = vmatpush1.msra.mxu0 0.0
        %344 = vmatprep.subr.mxu0 0.0
        %345 = vmatpush1.msra.mxu0 0.0
        %346 = vmatprep.subr.mxu0 0.0
        %347 = vmatpush1.msra.mxu0 0.0
        %348 = vmatprep.subr.mxu0 0.0
        %349 = vmatpush1.msra.mxu0 0.0
        %350 = vmatprep.subr.mxu0 0.0
        %351 = vmatpush1.msra.mxu0 0.0
        %352 = vmatprep.subr.mxu0 0.0
        %353 = vmatpush1.msra.mxu0 0.0
        %354 = vmatprep.subr.mxu0 0.0
        %355 = vmatpush1.msra.mxu0 0.0
        %356 = vmatprep.subr.mxu0 0.0
        %357 = vmatpush1.msra.mxu0 0.0
        %358 = vmatprep.subr.mxu0 0.0
        %359 = vmatpush1.msra.mxu0 0.0
        %360 = vmatprep.subr.mxu0 0.0
        %361 = vmatpush1.msra.mxu0 0.0
        %362 = vmatprep.subr.mxu0 0.0
        %363 = vmatpush1.msra.mxu0 0.0
        %364 = vmatprep.subr.mxu0 0.0
        %365 = vmatpush1.msra.mxu0 0.0
        %366 = vmatprep.subr.mxu0 0.0
        %367 = vmatpush1.msra.mxu0 0.0
        %368 = vmatprep.subr.mxu0 0.0
        %369 = vmatpush1.msra.mxu0 0.0
        %370 = vmatprep.subr.mxu0 0.0
        %371 = vmatpush1.msra.mxu0 0.0
        %372 = vmatprep.subr.mxu0 0.0
        %373 = vmatpush1.msra.mxu0 0.0
        %374 = vmatprep.subr.mxu0 0.0
        %375 = vmatpush1.msra.mxu0 0.0
        %376 = vmatprep.subr.mxu0 0.0
        %377 = vmatpush1.msra.mxu0 0.0
        %378 = vmatprep.subr.mxu0 0.0
        %379 = vmatpush1.msra.mxu0 0.0
        %380 = vmatprep.subr.mxu0 0.0
        %381 = vmatpush1.msra.mxu0 0.0
        %382 = vmatprep.mubr.f32.mxu0 0.0
        %v383 = vand.u32 %v313, 4294901760
        %v384 = vsub.f32 %v313, %v383
        %v385 = vand.u32 %v384, 4294901760
        %v386 = vsub.f32 %v384, %v385
        %v387 = vand.u32 %v386, 4294901760
        %388 = vmatmul.mubr.f32.gmra.mrb[0].mxu0 %v387
        %v389 = vpop.f32.mrb[0].mxu0
        %v390 = vadd.f32 0.0, %v389
        %v391 = vpop.f32.mrb[0].mxu0
        %392 = vdwg.mxu0
        %393 = vmatprep.subr.mxu0 0.0
        %v394 = vand.u32 %v307, 4294901760
        %v395 = vsub.f32 %v307, %v394
        %v396 = vand.u32 %v395, 4294901760
        %v397 = vsub.f32 %v395, %v396
        %v398 = vand.u32 %v397, 4294901760
        %399 = vmatpush1.msra.mxu0 %v398
        %400 = vmatprep.subr.mxu0 0.0
        %v401 = vand.u32 %v308, 4294901760
        %v402 = vsub.f32 %v308, %v401
        %v403 = vand.u32 %v402, 4294901760
        %v404 = vsub.f32 %v402, %v403
        %v405 = vand.u32 %v404, 4294901760
        %406 = vmatpush1.msra.mxu0 %v405
        %407 = vmatprep.subr.mxu0 0.0
        %v408 = vand.u32 %v309, 4294901760
        %v409 = vsub.f32 %v309, %v408
        %v410 = vand.u32 %v409, 4294901760
        %v411 = vsub.f32 %v409, %v410
        %v412 = vand.u32 %v411, 4294901760
        %413 = vmatpush1.msra.mxu0 %v412
        %414 = vmatprep.subr.mxu0 0.0
        %415 = vmatpush1.msra.mxu0 0.0
        %416 = vmatprep.subr.mxu0 0.0
        %417 = vmatpush1.msra.mxu0 0.0
        %418 = vmatprep.subr.mxu0 0.0
        %419 = vmatpush1.msra.mxu0 0.0
        %420 = vmatprep.subr.mxu0 0.0
        %421 = vmatpush1.msra.mxu0 0.0
        %422 = vmatprep.subr.mxu0 0.0
        %423 = vmatpush1.msra.mxu0 0.0
        %424 = vmatprep.subr.mxu0 0.0
        %425 = vmatpush1.msra.mxu0 0.0
        %426 = vmatprep.subr.mxu0 0.0
        %427 = vmatpush1.msra.mxu0 0.0
        %428 = vmatprep.subr.mxu0 0.0
        %429 = vmatpush1.msra.mxu0 0.0
        %430 = vmatprep.subr.mxu0 0.0
        %431 = vmatpush1.msra.mxu0 0.0
        %432 = vmatprep.subr.mxu0 0.0
        %433 = vmatpush1.msra.mxu0 0.0
        %434 = vmatprep.subr.mxu0 0.0
        %435 = vmatpush1.msra.mxu0 0.0
        %436 = vmatprep.subr.mxu0 0.0
        %437 = vmatpush1.msra.mxu0 0.0
        %438 = vmatprep.subr.mxu0 0.0
        %439 = vmatpush1.msra.mxu0 0.0
        %440 = vmatprep.subr.mxu0 0.0
        %441 = vmatpush1.msra.mxu0 0.0
        %442 = vmatprep.subr.mxu0 0.0
        %443 = vmatpush1.msra.mxu0 0.0
        %444 = vmatprep.subr.mxu0 0.0
        %445 = vmatpush1.msra.mxu0 0.0
        %446 = vmatprep.subr.mxu0 0.0
        %447 = vmatpush1.msra.mxu0 0.0
        %448 = vmatprep.subr.mxu0 0.0
        %449 = vmatpush1.msra.mxu0 0.0
        %450 = vmatprep.subr.mxu0 0.0
        %451 = vmatpush1.msra.mxu0 0.0
        %452 = vmatprep.subr.mxu0 0.0
        %453 = vmatpush1.msra.mxu0 0.0
        %454 = vmatprep.subr.mxu0 0.0
        %455 = vmatpush1.msra.mxu0 0.0
        %456 = vmatprep.subr.mxu0 0.0
        %457 = vmatpush1.msra.mxu0 0.0
        %458 = vmatprep.subr.mxu0 0.0
        %459 = vmatpush1.msra.mxu0 0.0
        %460 = vmatprep.subr.mxu0 0.0
        %461 = vmatpush1.msra.mxu0 0.0
        %462 = vmatprep.subr.mxu0 0.0
        %463 = vmatpush1.msra.mxu0 0.0
        %464 = vmatprep.subr.mxu0 0.0
        %465 = vmatpush1.msra.mxu0 0.0
        %466 = vmatprep.subr.mxu0 0.0
        %467 = vmatpush1.msra.mxu0 0.0
        %468 = vmatprep.subr.mxu0 0.0
        %469 = vmatpush1.msra.mxu0 0.0
        %470 = vmatprep.subr.mxu0 0.0
        %471 = vmatpush1.msra.mxu0 0.0
        %472 = vmatprep.mubr.f32.mxu0 0.0
        %v473 = vand.u32 %v313, 4294901760
        %474 = vmatmul.mubr.f32.gmra.mrb[0].mxu0 %v473
        %v475 = vpop.f32.mrb[0].mxu0
        %v476 = vadd.f32 %v390, %v475
        %v477 = vpop.f32.mrb[0].mxu0
        %478 = vdwg.mxu0
        %479 = vmatprep.subr.mxu0 0.0
        %v480 = vand.u32 %v307, 4294901760
        %v481 = vsub.f32 %v307, %v480
        %482 = vmatpush1.msra.mxu0 %v481
        %483 = vmatprep.subr.mxu0 0.0
        %v484 = vand.u32 %v308, 4294901760
        %v485 = vsub.f32 %v308, %v484
        %486 = vmatpush1.msra.mxu0 %v485
        %487 = vmatprep.subr.mxu0 0.0
        %v488 = vand.u32 %v309, 4294901760
        %v489 = vsub.f32 %v309, %v488
        %490 = vmatpush1.msra.mxu0 %v489
        %491 = vmatprep.subr.mxu0 0.0
        %492 = vmatpush1.msra.mxu0 0.0
        %493 = vmatprep.subr.mxu0 0.0
        %494 = vmatpush1.msra.mxu0 0.0
        %495 = vmatprep.subr.mxu0 0.0
        %496 = vmatpush1.msra.mxu0 0.0
        %497 = vmatprep.subr.mxu0 0.0
        %498 = vmatpush1.msra.mxu0 0.0
        %499 = vmatprep.subr.mxu0 0.0
        %500 = vmatpush1.msra.mxu0 0.0
        %501 = vmatprep.subr.mxu0 0.0
        %502 = vmatpush1.msra.mxu0 0.0
        %503 = vmatprep.subr.mxu0 0.0
        %504 = vmatpush1.msra.mxu0 0.0
        %505 = vmatprep.subr.mxu0 0.0
        %506 = vmatpush1.msra.mxu0 0.0
        %507 = vmatprep.subr.mxu0 0.0
        %508 = vmatpush1.msra.mxu0 0.0
        %509 = vmatprep.subr.mxu0 0.0
        %510 = vmatpush1.msra.mxu0 0.0
        %511 = vmatprep.subr.mxu0 0.0
        %512 = vmatpush1.msra.mxu0 0.0
        %513 = vmatprep.subr.mxu0 0.0
        %514 = vmatpush1.msra.mxu0 0.0
        %515 = vmatprep.subr.mxu0 0.0
        %516 = vmatpush1.msra.mxu0 0.0
        %517 = vmatprep.subr.mxu0 0.0
        %518 = vmatpush1.msra.mxu0 0.0
        %519 = vmatprep.subr.mxu0 0.0
        %520 = vmatpush1.msra.mxu0 0.0
        %521 = vmatprep.subr.mxu0 0.0
        %522 = vmatpush1.msra.mxu0 0.0
        %523 = vmatprep.subr.mxu0 0.0
        %524 = vmatpush1.msra.mxu0 0.0
        %525 = vmatprep.subr.mxu0 0.0
        %526 = vmatpush1.msra.mxu0 0.0
        %527 = vmatprep.subr.mxu0 0.0
        %528 = vmatpush1.msra.mxu0 0.0
        %529 = vmatprep.subr.mxu0 0.0
        %530 = vmatpush1.msra.mxu0 0.0
        %531 = vmatprep.subr.mxu0 0.0
        %532 = vmatpush1.msra.mxu0 0.0
        %533 = vmatprep.subr.mxu0 0.0
        %534 = vmatpush1.msra.mxu0 0.0
        %535 = vmatprep.subr.mxu0 0.0
        %536 = vmatpush1.msra.mxu0 0.0
        %537 = vmatprep.subr.mxu0 0.0
        %538 = vmatpush1.msra.mxu0 0.0
        %539 = vmatprep.subr.mxu0 0.0
        %540 = vmatpush1.msra.mxu0 0.0
        %541 = vmatprep.subr.mxu0 0.0
        %542 = vmatpush1.msra.mxu0 0.0
        %543 = vmatprep.subr.mxu0 0.0
        %544 = vmatpush1.msra.mxu0 0.0
        %545 = vmatprep.subr.mxu0 0.0
        %546 = vmatpush1.msra.mxu0 0.0
        %547 = vmatprep.subr.mxu0 0.0
        %548 = vmatpush1.msra.mxu0 0.0
        %549 = vmatprep.mubr.f32.mxu0 0.0
        %v550 = vand.u32 %v313, 4294901760
        %v551 = vsub.f32 %v313, %v550
        %552 = vmatmul.mubr.f32.gmra.mrb[0].mxu0 %v551
        %v553 = vpop.f32.mrb[0].mxu0
        %v554 = vadd.f32 %v476, %v553
        %v555 = vpop.f32.mrb[0].mxu0
        %556 = vdwg.mxu0
        %557 = vmatprep.subr.mxu0 0.0
        %v558 = vand.u32 %v307, 4294901760
        %559 = vmatpush1.msra.mxu0 %v558
        %560 = vmatprep.subr.mxu0 0.0
        %v561 = vand.u32 %v308, 4294901760
        %562 = vmatpush1.msra.mxu0 %v561
        %563 = vmatprep.subr.mxu0 0.0
        %v564 = vand.u32 %v309, 4294901760
        %565 = vmatpush1.msra.mxu0 %v564
        %566 = vmatprep.subr.mxu0 0.0
        %567 = vmatpush1.msra.mxu0 0.0
        %568 = vmatprep.subr.mxu0 0.0
        %569 = vmatpush1.msra.mxu0 0.0
        %570 = vmatprep.subr.mxu0 0.0
        %571 = vmatpush1.msra.mxu0 0.0
        %572 = vmatprep.subr.mxu0 0.0
        %573 = vmatpush1.msra.mxu0 0.0
        %574 = vmatprep.subr.mxu0 0.0
        %575 = vmatpush1.msra.mxu0 0.0
        %576 = vmatprep.subr.mxu0 0.0
        %577 = vmatpush1.msra.mxu0 0.0
        %578 = vmatprep.subr.mxu0 0.0
        %579 = vmatpush1.msra.mxu0 0.0
        %580 = vmatprep.subr.mxu0 0.0
        %581 = vmatpush1.msra.mxu0 0.0
        %582 = vmatprep.subr.mxu0 0.0
        %583 = vmatpush1.msra.mxu0 0.0
        %584 = vmatprep.subr.mxu0 0.0
        %585 = vmatpush1.msra.mxu0 0.0
        %586 = vmatprep.subr.mxu0 0.0
        %587 = vmatpush1.msra.mxu0 0.0
        %588 = vmatprep.subr.mxu0 0.0
        %589 = vmatpush1.msra.mxu0 0.0
        %590 = vmatprep.subr.mxu0 0.0
        %591 = vmatpush1.msra.mxu0 0.0
        %592 = vmatprep.subr.mxu0 0.0
        %593 = vmatpush1.msra.mxu0 0.0
        %594 = vmatprep.subr.mxu0 0.0
        %595 = vmatpush1.msra.mxu0 0.0
        %596 = vmatprep.subr.mxu0 0.0
        %597 = vmatpush1.msra.mxu0 0.0
        %598 = vmatprep.subr.mxu0 0.0
        %599 = vmatpush1.msra.mxu0 0.0
        %600 = vmatprep.subr.mxu0 0.0
        %601 = vmatpush1.msra.mxu0 0.0
        %602 = vmatprep.subr.mxu0 0.0
        %603 = vmatpush1.msra.mxu0 0.0
        %604 = vmatprep.subr.mxu0 0.0
        %605 = vmatpush1.msra.mxu0 0.0
        %606 = vmatprep.subr.mxu0 0.0
        %607 = vmatpush1.msra.mxu0 0.0
        %608 = vmatprep.subr.mxu0 0.0
        %609 = vmatpush1.msra.mxu0 0.0
        %610 = vmatprep.subr.mxu0 0.0
        %611 = vmatpush1.msra.mxu0 0.0
        %612 = vmatprep.subr.mxu0 0.0
        %613 = vmatpush1.msra.mxu0 0.0
        %614 = vmatprep.subr.mxu0 0.0
        %615 = vmatpush1.msra.mxu0 0.0
        %616 = vmatprep.subr.mxu0 0.0
        %617 = vmatpush1.msra.mxu0 0.0
        %618 = vmatprep.subr.mxu0 0.0
        %619 = vmatpush1.msra.mxu0 0.0
        %620 = vmatprep.subr.mxu0 0.0
        %621 = vmatpush1.msra.mxu0 0.0
        %622 = vmatprep.subr.mxu0 0.0
        %623 = vmatpush1.msra.mxu0 0.0
        %624 = vmatprep.mubr.f32.mxu0 0.0
        %v625 = vand.u32 %v313, 4294901760
        %v626 = vsub.f32 %v313, %v625
        %v627 = vand.u32 %v626, 4294901760
        %628 = vmatmul.mubr.f32.gmra.mrb[0].mxu0 %v627
        %v629 = vpop.f32.mrb[0].mxu0
        %v630 = vadd.f32 %v554, %v629
        %v631 = vpop.f32.mrb[0].mxu0
        %632 = vdwg.mxu0
        %633 = vmatprep.subr.mxu0 0.0
        %v634 = vand.u32 %v307, 4294901760
        %v635 = vsub.f32 %v307, %v634
        %v636 = vand.u32 %v635, 4294901760
        %637 = vmatpush1.msra.mxu0 %v636
        %638 = vmatprep.subr.mxu0 0.0
        %v639 = vand.u32 %v308, 4294901760
        %v640 = vsub.f32 %v308, %v639
        %v641 = vand.u32 %v640, 4294901760
        %642 = vmatpush1.msra.mxu0 %v641
        %643 = vmatprep.subr.mxu0 0.0
        %v644 = vand.u32 %v309, 4294901760
        %v645 = vsub.f32 %v309, %v644
        %v646 = vand.u32 %v645, 4294901760
        %647 = vmatpush1.msra.mxu0 %v646
        %648 = vmatprep.subr.mxu0 0.0
        %649 = vmatpush1.msra.mxu0 0.0
        %650 = vmatprep.subr.mxu0 0.0
        %651 = vmatpush1.msra.mxu0 0.0
        %652 = vmatprep.subr.mxu0 0.0
        %653 = vmatpush1.msra.mxu0 0.0
        %654 = vmatprep.subr.mxu0 0.0
        %655 = vmatpush1.msra.mxu0 0.0
        %656 = vmatprep.subr.mxu0 0.0
        %657 = vmatpush1.msra.mxu0 0.0
        %658 = vmatprep.subr.mxu0 0.0
        %659 = vmatpush1.msra.mxu0 0.0
        %660 = vmatprep.subr.mxu0 0.0
        %661 = vmatpush1.msra.mxu0 0.0
        %662 = vmatprep.subr.mxu0 0.0
        %663 = vmatpush1.msra.mxu0 0.0
        %664 = vmatprep.subr.mxu0 0.0
        %665 = vmatpush1.msra.mxu0 0.0
        %666 = vmatprep.subr.mxu0 0.0
        %667 = vmatpush1.msra.mxu0 0.0
        %668 = vmatprep.subr.mxu0 0.0
        %669 = vmatpush1.msra.mxu0 0.0
        %670 = vmatprep.subr.mxu0 0.0
        %671 = vmatpush1.msra.mxu0 0.0
        %672 = vmatprep.subr.mxu0 0.0
        %673 = vmatpush1.msra.mxu0 0.0
        %674 = vmatprep.subr.mxu0 0.0
        %675 = vmatpush1.msra.mxu0 0.0
        %676 = vmatprep.subr.mxu0 0.0
        %677 = vmatpush1.msra.mxu0 0.0
        %678 = vmatprep.subr.mxu0 0.0
        %679 = vmatpush1.msra.mxu0 0.0
        %680 = vmatprep.subr.mxu0 0.0
        %681 = vmatpush1.msra.mxu0 0.0
        %682 = vmatprep.subr.mxu0 0.0
        %683 = vmatpush1.msra.mxu0 0.0
        %684 = vmatprep.subr.mxu0 0.0
        %685 = vmatpush1.msra.mxu0 0.0
        %686 = vmatprep.subr.mxu0 0.0
        %687 = vmatpush1.msra.mxu0 0.0
        %688 = vmatprep.subr.mxu0 0.0
        %689 = vmatpush1.msra.mxu0 0.0
        %690 = vmatprep.subr.mxu0 0.0
        %691 = vmatpush1.msra.mxu0 0.0
        %692 = vmatprep.subr.mxu0 0.0
        %693 = vmatpush1.msra.mxu0 0.0
        %694 = vmatprep.subr.mxu0 0.0
        %695 = vmatpush1.msra.mxu0 0.0
        %696 = vmatprep.subr.mxu0 0.0
        %697 = vmatpush1.msra.mxu0 0.0
        %698 = vmatprep.subr.mxu0 0.0
        %699 = vmatpush1.msra.mxu0 0.0
        %700 = vmatprep.subr.mxu0 0.0
        %701 = vmatpush1.msra.mxu0 0.0
        %702 = vmatprep.subr.mxu0 0.0
        %703 = vmatpush1.msra.mxu0 0.0
        %704 = vmatprep.subr.mxu0 0.0
        %705 = vmatpush1.msra.mxu0 0.0
        %706 = vmatprep.mubr.f32.mxu0 0.0
        %v707 = vand.u32 %v313, 4294901760
        %708 = vmatmul.mubr.f32.gmra.mrb[0].mxu0 %v707
        %v709 = vpop.f32.mrb[0].mxu0
        %v710 = vadd.f32 %v630, %v709
        %v711 = vpop.f32.mrb[0].mxu0
        %712 = vdwg.mxu0
        %713 = vmatprep.subr.mxu0 0.0
        %v714 = vand.u32 %v307, 4294901760
        %715 = vmatpush1.msra.mxu0 %v714
        %716 = vmatprep.subr.mxu0 0.0
        %v717 = vand.u32 %v308, 4294901760
        %718 = vmatpush1.msra.mxu0 %v717
        %719 = vmatprep.subr.mxu0 0.0
        %v720 = vand.u32 %v309, 4294901760
        %721 = vmatpush1.msra.mxu0 %v720
        %722 = vmatprep.subr.mxu0 0.0
        %723 = vmatpush1.msra.mxu0 0.0
        %724 = vmatprep.subr.mxu0 0.0
        %725 = vmatpush1.msra.mxu0 0.0
        %726 = vmatprep.subr.mxu0 0.0
        %727 = vmatpush1.msra.mxu0 0.0
        %728 = vmatprep.subr.mxu0 0.0
        %729 = vmatpush1.msra.mxu0 0.0
        %730 = vmatprep.subr.mxu0 0.0
        %731 = vmatpush1.msra.mxu0 0.0
        %732 = vmatprep.subr.mxu0 0.0
        %733 = vmatpush1.msra.mxu0 0.0
        %734 = vmatprep.subr.mxu0 0.0
        %735 = vmatpush1.msra.mxu0 0.0
        %736 = vmatprep.subr.mxu0 0.0
        %737 = vmatpush1.msra.mxu0 0.0
        %738 = vmatprep.subr.mxu0 0.0
        %739 = vmatpush1.msra.mxu0 0.0
        %740 = vmatprep.subr.mxu0 0.0
        %741 = vmatpush1.msra.mxu0 0.0
        %742 = vmatprep.subr.mxu0 0.0
        %743 = vmatpush1.msra.mxu0 0.0
        %744 = vmatprep.subr.mxu0 0.0
        %745 = vmatpush1.msra.mxu0 0.0
        %746 = vmatprep.subr.mxu0 0.0
        %747 = vmatpush1.msra.mxu0 0.0
        %748 = vmatprep.subr.mxu0 0.0
        %749 = vmatpush1.msra.mxu0 0.0
        %750 = vmatprep.subr.mxu0 0.0
        %751 = vmatpush1.msra.mxu0 0.0
        %752 = vmatprep.subr.mxu0 0.0
        %753 = vmatpush1.msra.mxu0 0.0
        %754 = vmatprep.subr.mxu0 0.0
        %755 = vmatpush1.msra.mxu0 0.0
        %756 = vmatprep.subr.mxu0 0.0
        %757 = vmatpush1.msra.mxu0 0.0
        %758 = vmatprep.subr.mxu0 0.0
        %759 = vmatpush1.msra.mxu0 0.0
        %760 = vmatprep.subr.mxu0 0.0
        %761 = vmatpush1.msra.mxu0 0.0
        %762 = vmatprep.subr.mxu0 0.0
        %763 = vmatpush1.msra.mxu0 0.0
        %764 = vmatprep.subr.mxu0 0.0
        %765 = vmatpush1.msra.mxu0 0.0
        %766 = vmatprep.subr.mxu0 0.0
        %767 = vmatpush1.msra.mxu0 0.0
        %768 = vmatprep.subr.mxu0 0.0
        %769 = vmatpush1.msra.mxu0 0.0
        %770 = vmatprep.subr.mxu0 0.0
        %771 = vmatpush1.msra.mxu0 0.0
        %772 = vmatprep.subr.mxu0 0.0
        %773 = vmatpush1.msra.mxu0 0.0
        %774 = vmatprep.subr.mxu0 0.0
        %775 = vmatpush1.msra.mxu0 0.0
        %776 = vmatprep.subr.mxu0 0.0
        %777 = vmatpush1.msra.mxu0 0.0
        %778 = vmatprep.subr.mxu0 0.0
        %779 = vmatpush1.msra.mxu0 0.0
        %780 = vmatprep.mubr.f32.mxu0 0.0
        %v781 = vand.u32 %v313, 4294901760
        %782 = vmatmul.mubr.f32.gmra.mrb[0].mxu0 %v781
        %v783 = vpop.f32.mrb[0].mxu0
        %v784 = vadd.f32 %v710, %v783
        %v785 = vpop.f32.mrb[0].mxu0
        %786 = vdwg.mxu0
        %787 = vst.msk [vmem:[%s245] sm:$0xff] %vm311, %v784
        %s788 = sand.u32 %s133, 1
        %s789 = scalar_lea.sflag [#allocation4], %s788
        %s790 = sand.u32 %s133, 1
        %s791 = smul.addr %s790, 8
        %s792 = scalar_lea.vmem [#allocation5], %s791
        // Predicated region
        $region41: #{tpu_custom_call.1} parent=35 // pred_check
          %p793 = pneg %p143
        $region42: #{tpu_custom_call.1} parent=35 // pred_check_branch
          %795 = sbr.rel (%p793) target = $region44
        $region43: #{tpu_custom_call.1} parent=35 // pred_region
          %s797 = ssub.s32 128, 128
          %798 = vsyncadd %s789, %s797
          %s799 = smul.addr %s21, 128
          %s800 = scalar_lea.hbm %s4, %s799
          %s802 = sshll.u32 %s792, 4
          %s803 = int_to_ptr.vmem [resolvable:$true] %s802
          %805 = dma.vmem_to_hbm [thread:$0]  %s803, 128, %s800, %s789
        $region44: #{tpu_custom_call.1} parent=35 // pred_fallthru
          _
      $region36: #{tpu_custom_call.1} parent=5 // pred_fallthru
        _
      %p806 = scmp.le.s32.totalorder 2, %s16
      // Predicated region
      $region45: #{tpu_custom_call.1} parent=5 // pred_check
        %p807 = pneg %p806
      $region46: #{tpu_custom_call.1} parent=5 // pred_check_branch
        %809 = sbr.rel (%p807) target = $region48
      $region47: #{tpu_custom_call.1} parent=5 // pred_region
        %s810 = ssub.s32 %s16, 2
        // Predicated region
        $region49: #{tpu_custom_call.1} parent=47 // pred_check
          %p811 = pneg %p149
        $region50: #{tpu_custom_call.1} parent=47 // pred_check_branch
          %813 = sbr.rel (%p811) target = $region52
        $region51: #{tpu_custom_call.1} parent=47 // pred_region
          %s814 = sand.u32 %s134, 1
          %s815 = scalar_lea.sflag [#allocation4], %s814
          %s816 = sand.u32 %s134, 1
          %s817 = smul.addr %s816, 8
          %s818 = scalar_lea.vmem [#allocation5], %s817
          %819 = dma.done %s815, 128
        $region52: #{tpu_custom_call.1} parent=47 // pred_fallthru
          _
      $region48: #{tpu_custom_call.1} parent=5 // pred_fallthru
        _
    $region6: #{tpu_custom_call.1} parent=1 // loop_footer
      %s20 = sadd.s32 1, %s16
    $region7: #{tpu_custom_call.1} parent=1 // loop_footer_branch
      %15 = sbr.rel target = $region3
    $region8: #{tpu_custom_call.1} parent=1 // loop_exit
      _
    %820 = vsyncpa [#allocation3], 1
    %s821 = scalar_lea.sflag [#allocation3], 1
    %822 = vsyncpa %s821, 1
    %823 = vsyncpa [#allocation4], 1
    %s824 = scalar_lea.sflag [#allocation4], 1
    %825 = vsyncpa %s824, 1

</llo_original>
